<compile_context>
chip_gen: v5e
topology: v5e:2x2
jax: 0.10.0
libtpu: 0.0.40
codegen_flags: <defaults>
</compile_context>

<pallas_src>
import jax
import jax.numpy as jnp
from jax.experimental import pallas as pl
from jax.experimental.pallas import tpu as pltpu

HIDDEN = 64
SUBLANE = 8
_MIN_SPLIT_ROWS = 256  # don't split mid-size batches into tiles smaller than this


def _round_up(n, m):
    return ((n + m - 1) // m) * m


def _pick_batch_tile(B, batch_tile):
    """Pick a sublane-aligned batch tile; keep >=2 grid steps for mid-size B."""
    tb_max = max(SUBLANE, _round_up(int(batch_tile), SUBLANE))
    if B <= tb_max:
        if B >= 2 * _MIN_SPLIT_ROWS:
            # Split so the 1-D "parallel" grid has 2 steps (v7x: both TCs busy).
            return _round_up(pl.cdiv(B, 2), SUBLANE)
        return _round_up(B, SUBLANE)
    return tb_max


def policy_kernel(x_ref, w1_ref, b1_ref, w2_ref, b2_ref, w3_ref, b3_ref, out_ref):
    x = x_ref[...]                                                     # [tb, S]

    # fc1 + ReLU (MXU matmul, f32 accumulate; elementwise kept in f32 for v5e)
    h1 = jnp.dot(x, w1_ref[...], preferred_element_type=jnp.float32) + b1_ref[...]
    h1 = jnp.maximum(h1, 0.0)

    # fc2 + ReLU (cast LHS to the weight dtype so the optional bf16 path feeds
    # the MXU with matching operand dtypes; no-op in the f32 default path)
    h2 = jnp.dot(h1.astype(w2_ref.dtype), w2_ref[...],
                 preferred_element_type=jnp.float32) + b2_ref[...]
    h2 = jnp.maximum(h2, 0.0)

    # fc3 -> logits [tb, A] (A is the real, unpadded action dim)
    logits = jnp.dot(h2.astype(w3_ref.dtype), w3_ref[...],
                     preferred_element_type=jnp.float32) + b3_ref[...]

    # numerically stable softmax over the action dim
    m = jnp.max(logits, axis=-1, keepdims=True)
    e = jnp.exp(logits - m)
    inv = pl.reciprocal(jnp.sum(e, axis=-1, keepdims=True), approx=False)
    out_ref[...] = (e * inv).astype(out_ref.dtype)


def policy_forward(x, params, *, batch_tile=1024, compute_dtype=None):
    """x: [B, S] f32; params from init_params.  Returns [B, A] probabilities (f32)."""
    w1, b1, w2, b2, w3, b3 = params
    B, S = x.shape
    A = w3.shape[1]

    if compute_dtype is not None:
        # v6e/v7x lever: narrow only the matmul operands (x + weights) to halve
        # the dominant x HBM stream; biases & elementwise math stay f32.
        x = x.astype(compute_dtype)
        w1 = w1.astype(compute_dtype)
        w2 = w2.astype(compute_dtype)
        w3 = w3.astype(compute_dtype)

    tb = _pick_batch_tile(B, batch_tile)
    grid = (pl.cdiv(B, tb),)

    w_bytes = sum(int(p.size) * p.dtype.itemsize for p in (w1, b1, w2, b2, w3, b3))
    cost = pl.CostEstimate(
        flops=2 * B * (S * HIDDEN + HIDDEN * HIDDEN + HIDDEN * A),
        transcendentals=B * A,
        bytes_accessed=int(x.size) * x.dtype.itemsize + 4 * B * A + w_bytes,
    )

    out = pl.pallas_call(
        policy_kernel,
        out_shape=jax.ShapeDtypeStruct((B, A), jnp.float32),
        grid_spec=pltpu.PrefetchScalarGridSpec(
            num_scalar_prefetch=0,
            grid=grid,
            in_specs=[
                pl.BlockSpec((tb, S), lambda i: (i, 0)),          # x: tiled on B
                pl.BlockSpec((S, HIDDEN), lambda i: (0, 0)),      # weights VMEM-resident
                pl.BlockSpec((1, HIDDEN), lambda i: (0, 0)),
                pl.BlockSpec((HIDDEN, HIDDEN), lambda i: (0, 0)),
                pl.BlockSpec((1, HIDDEN), lambda i: (0, 0)),
                pl.BlockSpec((HIDDEN, A), lambda i: (0, 0)),      # real A, no pad
                pl.BlockSpec((1, A), lambda i: (0, 0)),
            ],
            out_specs=pl.BlockSpec((tb, A), lambda i: (i, 0)),    # unpadded output
        ),
        compiler_params=pltpu.CompilerParams(
            dimension_semantics=("parallel",)),
        cost_estimate=cost,
    )(x, w1, b1, w2, b2, w3, b3)

    return out


def init_params(key, state_size, action_size):
    """Deterministic init mimicking nn.Linear's uniform(-1/sqrt(in), 1/sqrt(in))."""
    ks = jax.random.split(key, 6)

    def linear(kw, kb, fan_in, fan_out):
        bound = 1.0 / jnp.sqrt(fan_in)
        w = jax.random.uniform(kw, (fan_in, fan_out), jnp.float32, -bound, bound)
        b = jax.random.uniform(kb, (1, fan_out), jnp.float32, -bound, bound)
        return w, b

    w1, b1 = linear(ks[0], ks[1], state_size, HIDDEN)
    w2, b2 = linear(ks[2], ks[3], HIDDEN, HIDDEN)
    w3, b3 = linear(ks[4], ks[5], HIDDEN, action_size)
    return (w1, b1, w2, b2, w3, b3)


def reference_forward(x, params):
    """Pure-JAX reference of the PyTorch forward."""
    w1, b1, w2, b2, w3, b3 = params
    h = jnp.maximum(x @ w1 + b1, 0.0)
    h = jnp.maximum(h @ w2 + b2, 0.0)
    return jax.nn.softmax(h @ w3 + b3, axis=-1)


if __name__ == "__main__":
    key = jax.random.PRNGKey(0)
    k_x, k_p, k_x2 = jax.random.split(key, 3)

    batch, state_size, action_size = 2, 8, 4
    x = jax.random.normal(k_x, (batch, state_size), dtype=jnp.float32)
    params = init_params(k_p, state_size, action_size)

    fwd = jax.jit(policy_forward)

    # small-batch check (shapes implied by the module)
    out = jax.block_until_ready(fwd(x, params))
    ref = reference_forward(x, params)
    assert out.shape == (batch, action_size)
    assert jnp.allclose(jnp.sum(out, axis=-1), 1.0, atol=1e-3)
    assert jnp.allclose(out, ref, atol=1e-3, rtol=1e-3)

    # batched rollout-style check: exercises the ragged last tile and the
    # 2-step "parallel" grid (mid-size batch is split so v7x uses both TCs)
    big_b = 1000
    xb = jax.random.normal(k_x2, (big_b, state_size), dtype=jnp.float32)
    outb = jax.block_until_ready(fwd(xb, params))
    refb = reference_forward(xb, params)
    assert outb.shape == (big_b, action_size)
    assert jnp.allclose(jnp.sum(outb, axis=-1), 1.0, atol=1e-3)
    assert jnp.allclose(outb, refb, atol=1e-3, rtol=1e-3)

    print("KERNEL_OK")
</pallas_src>

<mosaic_0001>
module attributes {stable_mosaic.version = 11 : i64} {
  func.func @policy_kernel(%arg0: i32, %arg1: memref<8x8xf32, #tpu.memory_space<vmem>>, %arg2: memref<8x64xf32, #tpu.memory_space<vmem>>, %arg3: memref<1x64xf32, #tpu.memory_space<vmem>>, %arg4: memref<64x64xf32, #tpu.memory_space<vmem>>, %arg5: memref<1x64xf32, #tpu.memory_space<vmem>>, %arg6: memref<64x4xf32, #tpu.memory_space<vmem>>, %arg7: memref<1x4xf32, #tpu.memory_space<vmem>>, %arg8: memref<8x4xf32, #tpu.memory_space<vmem>>) attributes {dimension_semantics = [#tpu.dimension_semantics<parallel>], iteration_bounds = array<i64: 1>, scalar_prefetch = 0 : i64, scratch_operands = 0 : i64, tpu.core_type = #tpu.core_type<tc>, window_params = [{transform_indices = @transform_0, window_bounds = array<i64: 8, 8>}, {pipeline_mode = #tpu.pipeline_mode<synchronous>, transform_indices = @transform_1, window_bounds = array<i64: 8, 64>}, {pipeline_mode = #tpu.pipeline_mode<synchronous>, transform_indices = @transform_2, window_bounds = array<i64: 1, 64>}, {pipeline_mode = #tpu.pipeline_mode<synchronous>, transform_indices = @transform_3, window_bounds = array<i64: 64, 64>}, {pipeline_mode = #tpu.pipeline_mode<synchronous>, transform_indices = @transform_4, window_bounds = array<i64: 1, 64>}, {pipeline_mode = #tpu.pipeline_mode<synchronous>, transform_indices = @transform_5, window_bounds = array<i64: 64, 4>}, {pipeline_mode = #tpu.pipeline_mode<synchronous>, transform_indices = @transform_6, window_bounds = array<i64: 1, 4>}, {transform_indices = @transform_7, window_bounds = array<i64: 8, 4>}]} {
    %c0 = arith.constant 0 : index
    %c0_0 = arith.constant 0 : index
    %0 = vector.load %arg1[%c0, %c0_0] : memref<8x8xf32, #tpu.memory_space<vmem>>, vector<8x8xf32>
    %c0_1 = arith.constant 0 : index
    %c0_2 = arith.constant 0 : index
    %1 = vector.load %arg2[%c0_1, %c0_2] : memref<8x64xf32, #tpu.memory_space<vmem>>, vector<8x64xf32>
    %cst = arith.constant dense<0.000000e+00> : vector<8x64xf32>
    %2 = tpu.matmul %0, %1, %cst {dimension_numbers = #tpu.dot_dimension_numbers<[1], [0], [0], [1], [0, 0, 1, 1], [], []>} : vector<8x8xf32>, vector<8x64xf32>, vector<8x64xf32> -> vector<8x64xf32>
    %c0_3 = arith.constant 0 : index
    %c0_4 = arith.constant 0 : index
    %3 = vector.load %arg3[%c0_3, %c0_4] : memref<1x64xf32, #tpu.memory_space<vmem>>, vector<1x64xf32>
    %4 = vector.broadcast %3 : vector<1x64xf32> to vector<8x64xf32>
    %5 = arith.addf %2, %4 : vector<8x64xf32>
    %cst_5 = arith.constant 0.000000e+00 : f32
    %6 = vector.broadcast %cst_5 : f32 to vector<8x64xf32>
    %7 = arith.maximumf %5, %6 : vector<8x64xf32>
    %c0_6 = arith.constant 0 : index
    %c0_7 = arith.constant 0 : index
    %8 = vector.load %arg4[%c0_6, %c0_7] : memref<64x64xf32, #tpu.memory_space<vmem>>, vector<64x64xf32>
    %cst_8 = arith.constant dense<0.000000e+00> : vector<8x64xf32>
    %9 = tpu.matmul %7, %8, %cst_8 {dimension_numbers = #tpu.dot_dimension_numbers<[1], [0], [0], [1], [0, 0, 1, 1], [], []>} : vector<8x64xf32>, vector<64x64xf32>, vector<8x64xf32> -> vector<8x64xf32>
    %c0_9 = arith.constant 0 : index
    %c0_10 = arith.constant 0 : index
    %10 = vector.load %arg5[%c0_9, %c0_10] : memref<1x64xf32, #tpu.memory_space<vmem>>, vector<1x64xf32>
    %11 = vector.broadcast %10 : vector<1x64xf32> to vector<8x64xf32>
    %12 = arith.addf %9, %11 : vector<8x64xf32>
    %cst_11 = arith.constant 0.000000e+00 : f32
    %13 = vector.broadcast %cst_11 : f32 to vector<8x64xf32>
    %14 = arith.maximumf %12, %13 : vector<8x64xf32>
    %c0_12 = arith.constant 0 : index
    %c0_13 = arith.constant 0 : index
    %15 = vector.load %arg6[%c0_12, %c0_13] : memref<64x4xf32, #tpu.memory_space<vmem>>, vector<64x4xf32>
    %cst_14 = arith.constant dense<0.000000e+00> : vector<8x4xf32>
    %16 = tpu.matmul %14, %15, %cst_14 {dimension_numbers = #tpu.dot_dimension_numbers<[1], [0], [0], [1], [0, 0, 1, 1], [], []>} : vector<8x64xf32>, vector<64x4xf32>, vector<8x4xf32> -> vector<8x4xf32>
    %c0_15 = arith.constant 0 : index
    %c0_16 = arith.constant 0 : index
    %17 = vector.load %arg7[%c0_15, %c0_16] : memref<1x4xf32, #tpu.memory_space<vmem>>, vector<1x4xf32>
    %18 = vector.broadcast %17 : vector<1x4xf32> to vector<8x4xf32>
    %19 = arith.addf %16, %18 : vector<8x4xf32>
    %cst_17 = arith.constant dense<0xFF800000> : vector<8xf32>
    %20 = vector.multi_reduction <maximumf>, %19, %cst_17 [1] : vector<8x4xf32> to vector<8xf32>
    %21 = vector.shape_cast %20 : vector<8xf32> to vector<8x1xf32>
    %22 = vector.broadcast %21 : vector<8x1xf32> to vector<8x4xf32>
    %23 = arith.subf %19, %22 : vector<8x4xf32>
    %24 = math.exp %23 : vector<8x4xf32>
    %cst_18 = arith.constant dense<0.000000e+00> : vector<8xf32>
    %25 = vector.multi_reduction <add>, %24, %cst_18 [1] : vector<8x4xf32> to vector<8xf32>
    %26 = vector.shape_cast %25 : vector<8xf32> to vector<8x1xf32>
    %27 = tpu.reciprocal %26 : vector<8x1xf32> -> vector<8x1xf32>
    %28 = vector.broadcast %27 : vector<8x1xf32> to vector<8x4xf32>
    %29 = arith.mulf %24, %28 : vector<8x4xf32>
    %c0_19 = arith.constant 0 : index
    %c0_20 = arith.constant 0 : index
    %30 = vector.load %arg8[%c0_19, %c0_20] : memref<8x4xf32, #tpu.memory_space<vmem>>, vector<8x4xf32>
    tpu.vector_store %arg8[%c0_19, %c0_20], %29 {strides = array<i32>} : memref<8x4xf32, #tpu.memory_space<vmem>>, vector<8x4xf32>,
    return
  }
  func.func @transform_0(%arg0: i32) -> (i32, i32) {
    %c0_i32 = arith.constant 0 : i32
    %c0_i32_0 = arith.constant 0 : i32
    return %arg0, %c0_i32 : i32, i32
  }
  func.func @transform_1(%arg0: i32) -> (i32, i32) {
    %c0_i32 = arith.constant 0 : i32
    %c0_i32_0 = arith.constant 0 : i32
    %c0_i32_1 = arith.constant 0 : i32
    return %c0_i32, %c0_i32_0 : i32, i32
  }
  func.func @transform_2(%arg0: i32) -> (i32, i32) {
    %c0_i32 = arith.constant 0 : i32
    %c0_i32_0 = arith.constant 0 : i32
    %c0_i32_1 = arith.constant 0 : i32
    return %c0_i32, %c0_i32_0 : i32, i32
  }
  func.func @transform_3(%arg0: i32) -> (i32, i32) {
    %c0_i32 = arith.constant 0 : i32
    %c0_i32_0 = arith.constant 0 : i32
    %c0_i32_1 = arith.constant 0 : i32
    return %c0_i32, %c0_i32_0 : i32, i32
  }
  func.func @transform_4(%arg0: i32) -> (i32, i32) {
    %c0_i32 = arith.constant 0 : i32
    %c0_i32_0 = arith.constant 0 : i32
    %c0_i32_1 = arith.constant 0 : i32
    return %c0_i32, %c0_i32_0 : i32, i32
  }
  func.func @transform_5(%arg0: i32) -> (i32, i32) {
    %c0_i32 = arith.constant 0 : i32
    %c0_i32_0 = arith.constant 0 : i32
    %c0_i32_1 = arith.constant 0 : i32
    return %c0_i32, %c0_i32_0 : i32, i32
  }
  func.func @transform_6(%arg0: i32) -> (i32, i32) {
    %c0_i32 = arith.constant 0 : i32
    %c0_i32_0 = arith.constant 0 : i32
    %c0_i32_1 = arith.constant 0 : i32
    return %c0_i32, %c0_i32_0 : i32, i32
  }
  func.func @transform_7(%arg0: i32) -> (i32, i32) {
    %c0_i32 = arith.constant 0 : i32
    %c0_i32_0 = arith.constant 0 : i32
    return %arg0, %c0_i32 : i32, i32
  }
}

</mosaic_0001>

<llo_original>
// kernel: policy_forward.1
$region0: #{policy_forward.1}
  #allocation0 [shape = 'u32[]', space=smem, size = 0x4, offset = 0x4, fixed_abs, tag = 'smem constant byte address 0x4 - core index']
  #allocation1 [shape = 'u32[72,128]{1,0:T(1,128)}', space=vmem, size = 0x9000, scoped, tag = 'internal scratch']
  %s0 = inlined_call_operand.vmem [shape: f32[2,8], index: 0, kind: input, shape index: {}]
  %s1 = inlined_call_operand.hbm [shape: f32[8,64], index: 1, kind: input, shape index: {}]
  %s2 = inlined_call_operand.vmem [shape: f32[1,64], index: 2, kind: input, shape index: {}]
  %s3 = inlined_call_operand.vmem [shape: f32[64,64], index: 3, kind: input, shape index: {}]
  %s4 = inlined_call_operand.vmem [shape: f32[1,64], index: 4, kind: input, shape index: {}]
  %s5 = inlined_call_operand.vmem [shape: f32[64,4], index: 5, kind: input, shape index: {}]
  %s6 = inlined_call_operand.vmem [shape: f32[1,4], index: 6, kind: input, shape index: {}]
  %s7 = inlined_call_operand.hbm [shape: f32[2,4], index: 7, kind: output, shape index: {}]
  %s8 = sld [smem:[#allocation0]]
  $region42: #{policy_forward.1} parent=0
    _
  %s10 = ssub.s32 1, %s8
  %s11 = scalar_select 0, %s10, %s8
  $region1: #{policy_forward.1} parent=0
    #allocation2 [shape = 'u8[4096]{0}', space=vmem, size = 0x1000, scoped, tag = 'input window, operand 1, single buffered']
    #allocation3 [shape = 's32[1]{0}', space=sflag, size = 0x4, scoped, tag = 'scoped memory for policy_forward.1']
    #allocation4 [shape = 's32[1]{0}', space=sflag, size = 0x4, scoped, tag = 'scoped memory for policy_forward.1']
    #allocation5 [shape = 'u8[4096]{0}', space=vmem, size = 0x1000, scoped, tag = 'output window, operand 0, single buffered']
    %12 = vsyncpa [#allocation3], 0
    %13 = vsyncpa [#allocation4], 0
    // Predicated region
    $region2: #{policy_forward.1} parent=1 // pred_check
      _
    $region3: #{policy_forward.1} parent=1 // pred_check_branch
      %15 = sbr.rel (0) target = $region5
    $region4: #{policy_forward.1} parent=1 // pred_region
      _
    $region5: #{policy_forward.1} parent=1 // pred_fallthru
      _
    // Predicated region
    $region6: #{policy_forward.1} parent=1 // pred_check
      _
    $region7: #{policy_forward.1} parent=1 // pred_check_branch
      %17 = sbr.rel (0) target = $region9
    $region8: #{policy_forward.1} parent=1 // pred_region
      %19 = vsyncadd [#allocation3], 0
      %s21 = sshll.u32 %s1, 4
      %s22 = int_to_ptr.hbm [resolvable:$true] %s21
      %s23 = sshll.u32 [#allocation2], 4
      %s24 = int_to_ptr.vmem [resolvable:$true] %s23
      %26 = dma.hbm_to_vmem [thread:$0]  %s22, 128, %s24, [#allocation3]
    $region9: #{policy_forward.1} parent=1 // pred_fallthru
      _
    // Predicated region
    $region10: #{policy_forward.1} parent=1 // pred_check
      _
    $region11: #{policy_forward.1} parent=1 // pred_check_branch
      %28 = sbr.rel (0) target = $region13
    $region12: #{policy_forward.1} parent=1 // pred_region
      _
    $region13: #{policy_forward.1} parent=1 // pred_fallthru
      _
    // Predicated region
    $region14: #{policy_forward.1} parent=1 // pred_check
      _
    $region15: #{policy_forward.1} parent=1 // pred_check_branch
      %30 = sbr.rel (0) target = $region17
    $region16: #{policy_forward.1} parent=1 // pred_region
      _
    $region17: #{policy_forward.1} parent=1 // pred_fallthru
      _
    // Predicated region
    $region18: #{policy_forward.1} parent=1 // pred_check
      _
    $region19: #{policy_forward.1} parent=1 // pred_check_branch
      %32 = sbr.rel (0) target = $region21
    $region20: #{policy_forward.1} parent=1 // pred_region
      _
    $region21: #{policy_forward.1} parent=1 // pred_fallthru
      _
    // Predicated region
    $region22: #{policy_forward.1} parent=1 // pred_check
      _
    $region23: #{policy_forward.1} parent=1 // pred_check_branch
      %34 = sbr.rel (0) target = $region25
    $region24: #{policy_forward.1} parent=1 // pred_region
      _
    $region25: #{policy_forward.1} parent=1 // pred_fallthru
      _
    // Predicated region
    $region26: #{policy_forward.1} parent=1 // pred_check
      _
    $region27: #{policy_forward.1} parent=1 // pred_check_branch
      %36 = sbr.rel (0) target = $region29
    $region28: #{policy_forward.1} parent=1 // pred_region
      _
    $region29: #{policy_forward.1} parent=1 // pred_fallthru
      _
    // Predicated region
    $region30: #{policy_forward.1} parent=1 // pred_check
      _
    $region31: #{policy_forward.1} parent=1 // pred_check_branch
      %38 = sbr.rel (0) target = $region33
    $region32: #{policy_forward.1} parent=1 // pred_region
      %40 = dma.done [#allocation3], 128
    $region33: #{policy_forward.1} parent=1 // pred_fallthru
      _
    %v41 = vld [vmem:[%s0] sm:$0xff]
    %v42 = vld [vmem:[#allocation2] sm:$0xff]
    %v43 = vld [vmem:[%s2] sm:$0x1]
    %v45 = vperm.slane %v43, 0
    %vm47 = vcmask 64512
    %v49 = vsel %vm47, %v41, 0
    %51 = vmatpush.msra.mxu0 0.0
    %52 = vmatpush.msra.mxu0 0.0
    %53 = vmatpush.msra.mxu0 0.0
    %54 = vmatpush.msra.mxu0 0.0
    %55 = vmatpush.msra.mxu0 0.0
    %56 = vmatpush.msra.mxu0 0.0
    %57 = vmatpush.msra.mxu0 0.0
    %58 = vmatpush.msra.mxu0 0.0
    %59 = vmatpush.msra.mxu0 0.0
    %60 = vmatpush.msra.mxu0 0.0
    %61 = vmatpush.msra.mxu0 0.0
    %62 = vmatpush.msra.mxu0 0.0
    %63 = vmatpush.msra.mxu0 0.0
    %64 = vmatpush.msra.mxu0 0.0
    %65 = vmatpush.msra.mxu0 0.0
    %66 = vmatpush.msra.mxu0 %v42
    %67 = vmatmul.f32.gmra.mxu0 %v49
    %v68 = vpop.f32.mrf.mxu0
    %v69 = vadd.f32 %v45, %v68
    %70 = vdwg.mxu0
    %v71 = vmax.f32 %v69, 0.0
    %v72 = vld [vmem:[%s3] sm:$0xff]
    %v73 = vld [vmem:[%s3 + $0x8] sm:$0xff]
    %v74 = vld [vmem:[%s3 + $0x10] sm:$0xff]
    %v75 = vld [vmem:[%s3 + $0x18] sm:$0xff]
    %v76 = vld [vmem:[%s3 + $0x20] sm:$0xff]
    %v77 = vld [vmem:[%s3 + $0x28] sm:$0xff]
    %v78 = vld [vmem:[%s3 + $0x30] sm:$0xff]
    %v79 = vld [vmem:[%s3 + $0x38] sm:$0xff]
    %v80 = vld [vmem:[%s4] sm:$0x1]
    %v82 = vperm.slane %v80, 0
    %vm84 = vcmask 523264
    %v86 = vsel %vm84, %v71, 0
    %88 = vmatpush.msra.mxu0 0.0
    %89 = vmatpush.msra.mxu0 0.0
    %90 = vmatpush.msra.mxu0 0.0
    %91 = vmatpush.msra.mxu0 0.0
    %92 = vmatpush.msra.mxu0 0.0
    %93 = vmatpush.msra.mxu0 0.0
    %94 = vmatpush.msra.mxu0 0.0
    %95 = vmatpush.msra.mxu0 0.0
    %96 = vmatpush.msra.mxu0 %v79
    %97 = vmatpush.msra.mxu0 %v78
    %98 = vmatpush.msra.mxu0 %v77
    %99 = vmatpush.msra.mxu0 %v76
    %100 = vmatpush.msra.mxu0 %v75
    %101 = vmatpush.msra.mxu0 %v74
    %102 = vmatpush.msra.mxu0 %v73
    %103 = vmatpush.msra.mxu0 %v72
    %104 = vmatmul.f32.gmra.mxu0 %v86
    %v105 = vpop.f32.mrf.mxu0
    %v106 = vadd.f32 %v82, %v105
    %107 = vdwg.mxu0
    %v108 = vmax.f32 %v106, 0.0
    %v109 = vld [vmem:[%s5] sm:$0xff]
    %v110 = vld [vmem:[%s5 + $0x8] sm:$0xff]
    %v111 = vld [vmem:[%s5 + $0x10] sm:$0xff]
    %v112 = vld [vmem:[%s5 + $0x18] sm:$0xff]
    %v113 = vld [vmem:[%s5 + $0x20] sm:$0xff]
    %v114 = vld [vmem:[%s5 + $0x28] sm:$0xff]
    %v115 = vld [vmem:[%s5 + $0x30] sm:$0xff]
    %v116 = vld [vmem:[%s5 + $0x38] sm:$0xff]
    %v117 = vld [vmem:[%s6] sm:$0x1]
    %v119 = vperm.slane %v117, 0
    %v122 = vsel %vm84, %v108, 0
    %124 = vmatpush.msra.mxu0 0.0
    %125 = vmatpush.msra.mxu0 0.0
    %126 = vmatpush.msra.mxu0 0.0
    %127 = vmatpush.msra.mxu0 0.0
    %128 = vmatpush.msra.mxu0 0.0
    %129 = vmatpush.msra.mxu0 0.0
    %130 = vmatpush.msra.mxu0 0.0
    %131 = vmatpush.msra.mxu0 0.0
    %132 = vmatpush.msra.mxu0 %v116
    %133 = vmatpush.msra.mxu0 %v115
    %134 = vmatpush.msra.mxu0 %v114
    %135 = vmatpush.msra.mxu0 %v113
    %136 = vmatpush.msra.mxu0 %v112
    %137 = vmatpush.msra.mxu0 %v111
    %138 = vmatpush.msra.mxu0 %v110
    %139 = vmatpush.msra.mxu0 %v109
    %140 = vmatmul.f32.gmra.mxu0 %v122
    %v141 = vpop.f32.mrf.mxu0
    %v142 = vadd.f32 %v119, %v141
    %143 = vdwg.mxu0
    %vm144 = vcmask 31744
    %v145 = vsel %vm144, %v142, -inf
    %146 = vmax.xlane.f32.xlu0 %v145
    %v147 = vpop.xlane.xlu0 %146
    %v148 = vsub.f32 %v142, %v147
    %v149 = vmul.f32 %v148, 1.442695
    %v150 = vpow.pop %v149
    %v151 = vsel %vm144, %v150, 0.0
    %152 = vadd.xlane.f32.xlu0 %v151
    %v153 = vpop.xlane.xlu0 %152
    %v154 = vrcp.pop %v153
    %v155 = vmul.f32 %v153, %v154
    %v156 = vsub.f32 1.0, %v155
    %v157 = vmul.f32 %v154, %v156
    %v158 = vadd.f32 %v154, %v157
    %vm159 = vweird.f32 %v153
    %vm160 = vweird.f32 %v154
    %vm161 = vmor %vm159, %vm160
    %v162 = vsel %vm161, %v154, %v158
    %v163 = vand.u32 2147483647, %v153
    %vm164 = vcmp.eq.f32.partialorder %v163, 8.507059e+37
    %v165 = vand.u32 %v153, 2147483648
    %v166 = vor.u32 1.1754944e-38, %v165
    %v167 = vsel %vm164, %v166, %v162
    %v168 = vmul.f32 %v150, %v167
    %169 = vst.msk [vmem:[#allocation5] sm:$0xff] %vm144, %v168
    // Predicated region
    $region34: #{policy_forward.1} parent=1 // pred_check
      _
    $region35: #{policy_forward.1} parent=1 // pred_check_branch
      %171 = sbr.rel (0) target = $region37
    $region36: #{policy_forward.1} parent=1 // pred_region
      %173 = vsyncadd [#allocation4], 96
      %s174 = sshll.u32 [#allocation5], 4
      %s175 = int_to_ptr.vmem [resolvable:$true] %s174
      %s176 = sshll.u32 %s7, 4
      %s177 = int_to_ptr.hbm [resolvable:$true] %s176
      %182 = dma.vmem_to_hbm [thread:$0]  %s175, 32, %s177, [#allocation4], 32, 32, 2
    $region37: #{policy_forward.1} parent=1 // pred_fallthru
      _
    // Predicated region
    $region38: #{policy_forward.1} parent=1 // pred_check
      _
    $region39: #{policy_forward.1} parent=1 // pred_check_branch
      %184 = sbr.rel (0) target = $region41
    $region40: #{policy_forward.1} parent=1 // pred_region
      %186 = dma.done [#allocation4], 128
    $region41: #{policy_forward.1} parent=1 // pred_fallthru
      _
    %187 = vsyncpa [#allocation3], 1
    %188 = vsyncpa [#allocation4], 1

</llo_original>
